<compile_context>
chip_gen: v7x
topology: tpu7x:2x2x1
jax: 0.10.0
libtpu: 0.0.40
codegen_flags: <defaults>
</compile_context>

<pallas_src>
import jax
import jax.numpy as jnp
from jax.experimental import pallas as pl
from jax.experimental.pallas import tpu as pltpu

_SUBLANE = 8
_LANE = 128
_BLOCK = _SUBLANE * _LANE  # 1024 batch elements = one full f32 vreg


def mlp_kernel(w1_ref, b1_ref, w2_ref, b2_ref, w3_ref, b3_ref, x_ref, o_ref):
    """One batch tile.

    x_ref: (Din, S, 8, 128) f32 VMEM block -- batch packed into full vregs.
    o_ref: (Dout, S, 8, 128) output block.
    w*/b*: SMEM refs in (out, in) / (out,) layout; scalar reads broadcast-MAC'd
           on the VPU (fully unrolled over the tiny 5/4/4/2 feature dims).
    """

    def dense(feats_in, w_ref, b_ref, *, relu):
        n_out, n_in = w_ref.shape
        outs = []
        for j in range(n_out):
            acc = feats_in[0] * w_ref[j, 0]
            for k in range(1, n_in):
                acc = acc + feats_in[k] * w_ref[j, k]
            acc = acc + b_ref[j]
            if relu:
                acc = jnp.maximum(acc, 0.0)
            outs.append(acc)
        return outs

    x = x_ref[...].astype(jnp.float32)            # (Din, S, 8, 128)
    feats = [x[k] for k in range(x.shape[0])]     # Din full-vreg (S, 8, 128) slabs
    h1 = dense(feats, w1_ref, b1_ref, relu=True)  # 4 slabs
    h2 = dense(h1, w2_ref, b2_ref, relu=True)     # 4 slabs
    out = dense(h2, w3_ref, b3_ref, relu=False)   # 2 slabs
    for j in range(len(out)):                     # lane-dense (S, 8, 128) stores
        o_ref[j] = out[j].astype(o_ref.dtype)


def ann_forward(x, w1, b1, w2, b2, w3, b3, *, batch_tile=None):
    """Forward pass of the 5->4->4->2 MLP.

    x: (B, 5); w1: (4, 5); b1: (4,); w2: (4, 4); b2: (4,); w3: (2, 4); b3: (2,).
    Returns (B, 2), matching relu(relu(x@w1.T+b1)@w2.T+b2)@w3.T+b3.
    """
    B, Din = x.shape
    H1, Din_w = w1.shape
    H2 = w2.shape[0]
    Dout = w3.shape[0]
    assert Din == Din_w and w2.shape[1] == H1 and w3.shape[1] == H2
    assert b1.shape == (H1,) and b2.shape == (H2,) and b3.shape == (Dout,)

    # Batch tile: multiples of 1024 (one full (8,128) vreg). Default targets
    # ~128K lanes/step for large batches (amortizes ~0.35us/step overhead;
    # double-buffered working set ~7 MiB, safe even on v7x's 64 MiB VMEM)
    # while keeping >=2 grid steps when B allows it (megacore sharding).
    if batch_tile is None:
        half = pl.cdiv(pl.cdiv(B, 2), _BLOCK) * _BLOCK
        batch_tile = int(min(131072, max(_BLOCK, half)))
    else:
        batch_tile = int(max(_BLOCK, pl.cdiv(batch_tile, _BLOCK) * _BLOCK))

    n_steps = pl.cdiv(B, batch_tile)
    Bp = n_steps * batch_tile
    S = batch_tile // _BLOCK

    # Layout plumbing: feature-major, pad ragged tail to the tile boundary
    # (pad fuses with the transpose), then a free row-major reshape packs the
    # batch into (8, 128) vreg blocks.
    xT = jnp.asarray(x, jnp.float32).T            # (Din, B)
    if Bp != B:
        xT = jnp.pad(xT, ((0, 0), (0, Bp - B)))
    x_blk = xT.reshape(Din, Bp // _BLOCK, _SUBLANE, _LANE)

    f32 = lambda a: jnp.asarray(a, jnp.float32)
    smem_spec = lambda: pl.BlockSpec(memory_space=pltpu.MemorySpace.SMEM)

    out_blk = pl.pallas_call(
        mlp_kernel,
        out_shape=jax.ShapeDtypeStruct((Dout, Bp // _BLOCK, _SUBLANE, _LANE),
                                       jnp.float32),
        grid=(n_steps,),
        in_specs=[
            smem_spec(),  # w1
            smem_spec(),  # b1
            smem_spec(),  # w2
            smem_spec(),  # b2
            smem_spec(),  # w3
            smem_spec(),  # b3
            pl.BlockSpec((Din, S, _SUBLANE, _LANE), lambda i: (0, i, 0, 0)),
        ],
        out_specs=pl.BlockSpec((Dout, S, _SUBLANE, _LANE),
                               lambda i: (0, i, 0, 0)),
        compiler_params=pltpu.CompilerParams(
            dimension_semantics=("parallel",),   # shard batch across TCs (v7x)
            vmem_limit_bytes=48 * 1024 * 1024,   # headroom; safe on v5e/v6e/v7x
        ),
    )(f32(w1), f32(b1), f32(w2), f32(b2), f32(w3), f32(b3), x_blk)

    out = out_blk.reshape(Dout, Bp)[:, :B].T      # (B, Dout)
    return out.astype(x.dtype)


def _init_params(key):
    """Mimic nn.Linear init: uniform(-1/sqrt(fan_in), 1/sqrt(fan_in))."""
    def linear(key, fan_in, fan_out):
        kw, kb = jax.random.split(key)
        bound = 1.0 / float(fan_in) ** 0.5
        w = jax.random.uniform(kw, (fan_out, fan_in), jnp.float32, -bound, bound)
        b = jax.random.uniform(kb, (fan_out,), jnp.float32, -bound, bound)
        return w, b

    k1, k2, k3 = jax.random.split(key, 3)
    w1, b1 = linear(k1, 5, 4)
    w2, b2 = linear(k2, 4, 4)
    w3, b3 = linear(k3, 4, 2)
    return w1, b1, w2, b2, w3, b3


def _reference(x, w1, b1, w2, b2, w3, b3):
    h1 = jnp.maximum(x @ w1.T + b1, 0.0)
    h2 = jnp.maximum(h1 @ w2.T + b2, 0.0)
    return h2 @ w3.T + b3


if __name__ == "__main__":
    key = jax.random.PRNGKey(0)
    kx, kp = jax.random.split(key)
    params = _init_params(kp)

    # Ragged batch, default tile selection (single 1024-lane step, padded tail).
    x = jax.random.normal(kx, (300, 5), dtype=jnp.float32)
    out = jax.block_until_ready(ann_forward(x, *params))
    ref = _reference(x, *params)
    assert out.shape == (300, 2), out.shape
    assert jnp.allclose(out, ref, atol=1e-5, rtol=1e-5)

    # Multi-step grid with a ragged last tile (3 steps of 1024 lanes).
    x2 = jax.random.normal(kx, (2500, 5), dtype=jnp.float32)
    out2 = jax.block_until_ready(ann_forward(x2, *params, batch_tile=1024))
    ref2 = _reference(x2, *params)
    assert out2.shape == (2500, 2), out2.shape
    assert jnp.allclose(out2, ref2, atol=1e-5, rtol=1e-5)

    # Tiny batch (heavy padding path).
    x3 = jax.random.normal(kx, (8, 5), dtype=jnp.float32)
    out3 = jax.block_until_ready(ann_forward(x3, *params))
    assert out3.shape == (8, 2), out3.shape
    assert jnp.allclose(out3, _reference(x3, *params), atol=1e-5, rtol=1e-5)

    print("KERNEL_OK")
</pallas_src>

<mosaic_0001>
module attributes {stable_mosaic.version = 11 : i64} {
  func.func @mlp_kernel(%arg0: i32, %arg1: memref<4x5xf32, #tpu.memory_space<smem>>, %arg2: memref<4xf32, #tpu.memory_space<smem>>, %arg3: memref<4x4xf32, #tpu.memory_space<smem>>, %arg4: memref<4xf32, #tpu.memory_space<smem>>, %arg5: memref<2x4xf32, #tpu.memory_space<smem>>, %arg6: memref<2xf32, #tpu.memory_space<smem>>, %arg7: memref<5x1x8x128xf32, #tpu.memory_space<vmem>>, %arg8: memref<2x1x8x128xf32, #tpu.memory_space<vmem>>) attributes {dimension_semantics = [#tpu.dimension_semantics<parallel>], iteration_bounds = array<i64: 1>, scalar_prefetch = 0 : i64, scratch_operands = 0 : i64, tpu.core_type = #tpu.core_type<tc>, window_params = [{transform_indices = @transform_0, window_bounds = array<i64: 4, 5>}, {transform_indices = @transform_1, window_bounds = array<i64: 4>}, {transform_indices = @transform_2, window_bounds = array<i64: 4, 4>}, {transform_indices = @transform_3, window_bounds = array<i64: 4>}, {transform_indices = @transform_4, window_bounds = array<i64: 2, 4>}, {transform_indices = @transform_5, window_bounds = array<i64: 2>}, {transform_indices = @transform_6, window_bounds = array<i64: 5, 1, 8, 128>}, {transform_indices = @transform_7, window_bounds = array<i64: 2, 1, 8, 128>}]} {
    %c0 = arith.constant 0 : index
    %c0_0 = arith.constant 0 : index
    %c0_1 = arith.constant 0 : index
    %c0_2 = arith.constant 0 : index
    %0 = vector.load %arg7[%c0, %c0_0, %c0_1, %c0_2] : memref<5x1x8x128xf32, #tpu.memory_space<vmem>>, vector<5x1x8x128xf32>
    %1 = vector.extract_strided_slice %0 {offsets = [0, 0, 0, 0], sizes = [1, 1, 8, 128], strides = [1, 1, 1, 1]} : vector<5x1x8x128xf32> to vector<1x1x8x128xf32>
    %2 = vector.shape_cast %1 : vector<1x1x8x128xf32> to vector<1x8x128xf32>
    %3 = vector.extract_strided_slice %0 {offsets = [1, 0, 0, 0], sizes = [1, 1, 8, 128], strides = [1, 1, 1, 1]} : vector<5x1x8x128xf32> to vector<1x1x8x128xf32>
    %4 = vector.shape_cast %3 : vector<1x1x8x128xf32> to vector<1x8x128xf32>
    %5 = vector.extract_strided_slice %0 {offsets = [2, 0, 0, 0], sizes = [1, 1, 8, 128], strides = [1, 1, 1, 1]} : vector<5x1x8x128xf32> to vector<1x1x8x128xf32>
    %6 = vector.shape_cast %5 : vector<1x1x8x128xf32> to vector<1x8x128xf32>
    %7 = vector.extract_strided_slice %0 {offsets = [3, 0, 0, 0], sizes = [1, 1, 8, 128], strides = [1, 1, 1, 1]} : vector<5x1x8x128xf32> to vector<1x1x8x128xf32>
    %8 = vector.shape_cast %7 : vector<1x1x8x128xf32> to vector<1x8x128xf32>
    %9 = vector.extract_strided_slice %0 {offsets = [4, 0, 0, 0], sizes = [1, 1, 8, 128], strides = [1, 1, 1, 1]} : vector<5x1x8x128xf32> to vector<1x1x8x128xf32>
    %10 = vector.shape_cast %9 : vector<1x1x8x128xf32> to vector<1x8x128xf32>
    %c0_3 = arith.constant 0 : index
    %c0_4 = arith.constant 0 : index
    %11 = memref.load %arg1[%c0_3, %c0_4] : memref<4x5xf32, #tpu.memory_space<smem>>
    %12 = vector.broadcast %11 : f32 to vector<1x8x128xf32>
    %13 = arith.mulf %2, %12 : vector<1x8x128xf32>
    %c0_5 = arith.constant 0 : index
    %c1 = arith.constant 1 : index
    %14 = memref.load %arg1[%c0_5, %c1] : memref<4x5xf32, #tpu.memory_space<smem>>
    %15 = vector.broadcast %14 : f32 to vector<1x8x128xf32>
    %16 = arith.mulf %4, %15 : vector<1x8x128xf32>
    %17 = arith.addf %13, %16 : vector<1x8x128xf32>
    %c0_6 = arith.constant 0 : index
    %c2 = arith.constant 2 : index
    %18 = memref.load %arg1[%c0_6, %c2] : memref<4x5xf32, #tpu.memory_space<smem>>
    %19 = vector.broadcast %18 : f32 to vector<1x8x128xf32>
    %20 = arith.mulf %6, %19 : vector<1x8x128xf32>
    %21 = arith.addf %17, %20 : vector<1x8x128xf32>
    %c0_7 = arith.constant 0 : index
    %c3 = arith.constant 3 : index
    %22 = memref.load %arg1[%c0_7, %c3] : memref<4x5xf32, #tpu.memory_space<smem>>
    %23 = vector.broadcast %22 : f32 to vector<1x8x128xf32>
    %24 = arith.mulf %8, %23 : vector<1x8x128xf32>
    %25 = arith.addf %21, %24 : vector<1x8x128xf32>
    %c0_8 = arith.constant 0 : index
    %c4 = arith.constant 4 : index
    %26 = memref.load %arg1[%c0_8, %c4] : memref<4x5xf32, #tpu.memory_space<smem>>
    %27 = vector.broadcast %26 : f32 to vector<1x8x128xf32>
    %28 = arith.mulf %10, %27 : vector<1x8x128xf32>
    %29 = arith.addf %25, %28 : vector<1x8x128xf32>
    %c0_9 = arith.constant 0 : index
    %30 = memref.load %arg2[%c0_9] : memref<4xf32, #tpu.memory_space<smem>>
    %31 = vector.broadcast %30 : f32 to vector<1x8x128xf32>
    %32 = arith.addf %29, %31 : vector<1x8x128xf32>
    %cst = arith.constant 0.000000e+00 : f32
    %33 = vector.broadcast %cst : f32 to vector<1x8x128xf32>
    %34 = arith.maximumf %32, %33 : vector<1x8x128xf32>
    %c1_10 = arith.constant 1 : index
    %c0_11 = arith.constant 0 : index
    %35 = memref.load %arg1[%c1_10, %c0_11] : memref<4x5xf32, #tpu.memory_space<smem>>
    %36 = vector.broadcast %35 : f32 to vector<1x8x128xf32>
    %37 = arith.mulf %2, %36 : vector<1x8x128xf32>
    %c1_12 = arith.constant 1 : index
    %c1_13 = arith.constant 1 : index
    %38 = memref.load %arg1[%c1_12, %c1_13] : memref<4x5xf32, #tpu.memory_space<smem>>
    %39 = vector.broadcast %38 : f32 to vector<1x8x128xf32>
    %40 = arith.mulf %4, %39 : vector<1x8x128xf32>
    %41 = arith.addf %37, %40 : vector<1x8x128xf32>
    %c1_14 = arith.constant 1 : index
    %c2_15 = arith.constant 2 : index
    %42 = memref.load %arg1[%c1_14, %c2_15] : memref<4x5xf32, #tpu.memory_space<smem>>
    %43 = vector.broadcast %42 : f32 to vector<1x8x128xf32>
    %44 = arith.mulf %6, %43 : vector<1x8x128xf32>
    %45 = arith.addf %41, %44 : vector<1x8x128xf32>
    %c1_16 = arith.constant 1 : index
    %c3_17 = arith.constant 3 : index
    %46 = memref.load %arg1[%c1_16, %c3_17] : memref<4x5xf32, #tpu.memory_space<smem>>
    %47 = vector.broadcast %46 : f32 to vector<1x8x128xf32>
    %48 = arith.mulf %8, %47 : vector<1x8x128xf32>
    %49 = arith.addf %45, %48 : vector<1x8x128xf32>
    %c1_18 = arith.constant 1 : index
    %c4_19 = arith.constant 4 : index
    %50 = memref.load %arg1[%c1_18, %c4_19] : memref<4x5xf32, #tpu.memory_space<smem>>
    %51 = vector.broadcast %50 : f32 to vector<1x8x128xf32>
    %52 = arith.mulf %10, %51 : vector<1x8x128xf32>
    %53 = arith.addf %49, %52 : vector<1x8x128xf32>
    %c1_20 = arith.constant 1 : index
    %54 = memref.load %arg2[%c1_20] : memref<4xf32, #tpu.memory_space<smem>>
    %55 = vector.broadcast %54 : f32 to vector<1x8x128xf32>
    %56 = arith.addf %53, %55 : vector<1x8x128xf32>
    %cst_21 = arith.constant 0.000000e+00 : f32
    %57 = vector.broadcast %cst_21 : f32 to vector<1x8x128xf32>
    %58 = arith.maximumf %56, %57 : vector<1x8x128xf32>
    %c2_22 = arith.constant 2 : index
    %c0_23 = arith.constant 0 : index
    %59 = memref.load %arg1[%c2_22, %c0_23] : memref<4x5xf32, #tpu.memory_space<smem>>
    %60 = vector.broadcast %59 : f32 to vector<1x8x128xf32>
    %61 = arith.mulf %2, %60 : vector<1x8x128xf32>
    %c2_24 = arith.constant 2 : index
    %c1_25 = arith.constant 1 : index
    %62 = memref.load %arg1[%c2_24, %c1_25] : memref<4x5xf32, #tpu.memory_space<smem>>
    %63 = vector.broadcast %62 : f32 to vector<1x8x128xf32>
    %64 = arith.mulf %4, %63 : vector<1x8x128xf32>
    %65 = arith.addf %61, %64 : vector<1x8x128xf32>
    %c2_26 = arith.constant 2 : index
    %c2_27 = arith.constant 2 : index
    %66 = memref.load %arg1[%c2_26, %c2_27] : memref<4x5xf32, #tpu.memory_space<smem>>
    %67 = vector.broadcast %66 : f32 to vector<1x8x128xf32>
    %68 = arith.mulf %6, %67 : vector<1x8x128xf32>
    %69 = arith.addf %65, %68 : vector<1x8x128xf32>
    %c2_28 = arith.constant 2 : index
    %c3_29 = arith.constant 3 : index
    %70 = memref.load %arg1[%c2_28, %c3_29] : memref<4x5xf32, #tpu.memory_space<smem>>
    %71 = vector.broadcast %70 : f32 to vector<1x8x128xf32>
    %72 = arith.mulf %8, %71 : vector<1x8x128xf32>
    %73 = arith.addf %69, %72 : vector<1x8x128xf32>
    %c2_30 = arith.constant 2 : index
    %c4_31 = arith.constant 4 : index
    %74 = memref.load %arg1[%c2_30, %c4_31] : memref<4x5xf32, #tpu.memory_space<smem>>
    %75 = vector.broadcast %74 : f32 to vector<1x8x128xf32>
    %76 = arith.mulf %10, %75 : vector<1x8x128xf32>
    %77 = arith.addf %73, %76 : vector<1x8x128xf32>
    %c2_32 = arith.constant 2 : index
    %78 = memref.load %arg2[%c2_32] : memref<4xf32, #tpu.memory_space<smem>>
    %79 = vector.broadcast %78 : f32 to vector<1x8x128xf32>
    %80 = arith.addf %77, %79 : vector<1x8x128xf32>
    %cst_33 = arith.constant 0.000000e+00 : f32
    %81 = vector.broadcast %cst_33 : f32 to vector<1x8x128xf32>
    %82 = arith.maximumf %80, %81 : vector<1x8x128xf32>
    %c3_34 = arith.constant 3 : index
    %c0_35 = arith.constant 0 : index
    %83 = memref.load %arg1[%c3_34, %c0_35] : memref<4x5xf32, #tpu.memory_space<smem>>
    %84 = vector.broadcast %83 : f32 to vector<1x8x128xf32>
    %85 = arith.mulf %2, %84 : vector<1x8x128xf32>
    %c3_36 = arith.constant 3 : index
    %c1_37 = arith.constant 1 : index
    %86 = memref.load %arg1[%c3_36, %c1_37] : memref<4x5xf32, #tpu.memory_space<smem>>
    %87 = vector.broadcast %86 : f32 to vector<1x8x128xf32>
    %88 = arith.mulf %4, %87 : vector<1x8x128xf32>
    %89 = arith.addf %85, %88 : vector<1x8x128xf32>
    %c3_38 = arith.constant 3 : index
    %c2_39 = arith.constant 2 : index
    %90 = memref.load %arg1[%c3_38, %c2_39] : memref<4x5xf32, #tpu.memory_space<smem>>
    %91 = vector.broadcast %90 : f32 to vector<1x8x128xf32>
    %92 = arith.mulf %6, %91 : vector<1x8x128xf32>
    %93 = arith.addf %89, %92 : vector<1x8x128xf32>
    %c3_40 = arith.constant 3 : index
    %c3_41 = arith.constant 3 : index
    %94 = memref.load %arg1[%c3_40, %c3_41] : memref<4x5xf32, #tpu.memory_space<smem>>
    %95 = vector.broadcast %94 : f32 to vector<1x8x128xf32>
    %96 = arith.mulf %8, %95 : vector<1x8x128xf32>
    %97 = arith.addf %93, %96 : vector<1x8x128xf32>
    %c3_42 = arith.constant 3 : index
    %c4_43 = arith.constant 4 : index
    %98 = memref.load %arg1[%c3_42, %c4_43] : memref<4x5xf32, #tpu.memory_space<smem>>
    %99 = vector.broadcast %98 : f32 to vector<1x8x128xf32>
    %100 = arith.mulf %10, %99 : vector<1x8x128xf32>
    %101 = arith.addf %97, %100 : vector<1x8x128xf32>
    %c3_44 = arith.constant 3 : index
    %102 = memref.load %arg2[%c3_44] : memref<4xf32, #tpu.memory_space<smem>>
    %103 = vector.broadcast %102 : f32 to vector<1x8x128xf32>
    %104 = arith.addf %101, %103 : vector<1x8x128xf32>
    %cst_45 = arith.constant 0.000000e+00 : f32
    %105 = vector.broadcast %cst_45 : f32 to vector<1x8x128xf32>
    %106 = arith.maximumf %104, %105 : vector<1x8x128xf32>
    %c0_46 = arith.constant 0 : index
    %c0_47 = arith.constant 0 : index
    %107 = memref.load %arg3[%c0_46, %c0_47] : memref<4x4xf32, #tpu.memory_space<smem>>
    %108 = vector.broadcast %107 : f32 to vector<1x8x128xf32>
    %109 = arith.mulf %34, %108 : vector<1x8x128xf32>
    %c0_48 = arith.constant 0 : index
    %c1_49 = arith.constant 1 : index
    %110 = memref.load %arg3[%c0_48, %c1_49] : memref<4x4xf32, #tpu.memory_space<smem>>
    %111 = vector.broadcast %110 : f32 to vector<1x8x128xf32>
    %112 = arith.mulf %58, %111 : vector<1x8x128xf32>
    %113 = arith.addf %109, %112 : vector<1x8x128xf32>
    %c0_50 = arith.constant 0 : index
    %c2_51 = arith.constant 2 : index
    %114 = memref.load %arg3[%c0_50, %c2_51] : memref<4x4xf32, #tpu.memory_space<smem>>
    %115 = vector.broadcast %114 : f32 to vector<1x8x128xf32>
    %116 = arith.mulf %82, %115 : vector<1x8x128xf32>
    %117 = arith.addf %113, %116 : vector<1x8x128xf32>
    %c0_52 = arith.constant 0 : index
    %c3_53 = arith.constant 3 : index
    %118 = memref.load %arg3[%c0_52, %c3_53] : memref<4x4xf32, #tpu.memory_space<smem>>
    %119 = vector.broadcast %118 : f32 to vector<1x8x128xf32>
    %120 = arith.mulf %106, %119 : vector<1x8x128xf32>
    %121 = arith.addf %117, %120 : vector<1x8x128xf32>
    %c0_54 = arith.constant 0 : index
    %122 = memref.load %arg4[%c0_54] : memref<4xf32, #tpu.memory_space<smem>>
    %123 = vector.broadcast %122 : f32 to vector<1x8x128xf32>
    %124 = arith.addf %121, %123 : vector<1x8x128xf32>
    %cst_55 = arith.constant 0.000000e+00 : f32
    %125 = vector.broadcast %cst_55 : f32 to vector<1x8x128xf32>
    %126 = arith.maximumf %124, %125 : vector<1x8x128xf32>
    %c1_56 = arith.constant 1 : index
    %c0_57 = arith.constant 0 : index
    %127 = memref.load %arg3[%c1_56, %c0_57] : memref<4x4xf32, #tpu.memory_space<smem>>
    %128 = vector.broadcast %127 : f32 to vector<1x8x128xf32>
    %129 = arith.mulf %34, %128 : vector<1x8x128xf32>
    %c1_58 = arith.constant 1 : index
    %c1_59 = arith.constant 1 : index
    %130 = memref.load %arg3[%c1_58, %c1_59] : memref<4x4xf32, #tpu.memory_space<smem>>
    %131 = vector.broadcast %130 : f32 to vector<1x8x128xf32>
    %132 = arith.mulf %58, %131 : vector<1x8x128xf32>
    %133 = arith.addf %129, %132 : vector<1x8x128xf32>
    %c1_60 = arith.constant 1 : index
    %c2_61 = arith.constant 2 : index
    %134 = memref.load %arg3[%c1_60, %c2_61] : memref<4x4xf32, #tpu.memory_space<smem>>
    %135 = vector.broadcast %134 : f32 to vector<1x8x128xf32>
    %136 = arith.mulf %82, %135 : vector<1x8x128xf32>
    %137 = arith.addf %133, %136 : vector<1x8x128xf32>
    %c1_62 = arith.constant 1 : index
    %c3_63 = arith.constant 3 : index
    %138 = memref.load %arg3[%c1_62, %c3_63] : memref<4x4xf32, #tpu.memory_space<smem>>
    %139 = vector.broadcast %138 : f32 to vector<1x8x128xf32>
    %140 = arith.mulf %106, %139 : vector<1x8x128xf32>
    %141 = arith.addf %137, %140 : vector<1x8x128xf32>
    %c1_64 = arith.constant 1 : index
    %142 = memref.load %arg4[%c1_64] : memref<4xf32, #tpu.memory_space<smem>>
    %143 = vector.broadcast %142 : f32 to vector<1x8x128xf32>
    %144 = arith.addf %141, %143 : vector<1x8x128xf32>
    %cst_65 = arith.constant 0.000000e+00 : f32
    %145 = vector.broadcast %cst_65 : f32 to vector<1x8x128xf32>
    %146 = arith.maximumf %144, %145 : vector<1x8x128xf32>
    %c2_66 = arith.constant 2 : index
    %c0_67 = arith.constant 0 : index
    %147 = memref.load %arg3[%c2_66, %c0_67] : memref<4x4xf32, #tpu.memory_space<smem>>
    %148 = vector.broadcast %147 : f32 to vector<1x8x128xf32>
    %149 = arith.mulf %34, %148 : vector<1x8x128xf32>
    %c2_68 = arith.constant 2 : index
    %c1_69 = arith.constant 1 : index
    %150 = memref.load %arg3[%c2_68, %c1_69] : memref<4x4xf32, #tpu.memory_space<smem>>
    %151 = vector.broadcast %150 : f32 to vector<1x8x128xf32>
    %152 = arith.mulf %58, %151 : vector<1x8x128xf32>
    %153 = arith.addf %149, %152 : vector<1x8x128xf32>
    %c2_70 = arith.constant 2 : index
    %c2_71 = arith.constant 2 : index
    %154 = memref.load %arg3[%c2_70, %c2_71] : memref<4x4xf32, #tpu.memory_space<smem>>
    %155 = vector.broadcast %154 : f32 to vector<1x8x128xf32>
    %156 = arith.mulf %82, %155 : vector<1x8x128xf32>
    %157 = arith.addf %153, %156 : vector<1x8x128xf32>
    %c2_72 = arith.constant 2 : index
    %c3_73 = arith.constant 3 : index
    %158 = memref.load %arg3[%c2_72, %c3_73] : memref<4x4xf32, #tpu.memory_space<smem>>
    %159 = vector.broadcast %158 : f32 to vector<1x8x128xf32>
    %160 = arith.mulf %106, %159 : vector<1x8x128xf32>
    %161 = arith.addf %157, %160 : vector<1x8x128xf32>
    %c2_74 = arith.constant 2 : index
    %162 = memref.load %arg4[%c2_74] : memref<4xf32, #tpu.memory_space<smem>>
    %163 = vector.broadcast %162 : f32 to vector<1x8x128xf32>
    %164 = arith.addf %161, %163 : vector<1x8x128xf32>
    %cst_75 = arith.constant 0.000000e+00 : f32
    %165 = vector.broadcast %cst_75 : f32 to vector<1x8x128xf32>
    %166 = arith.maximumf %164, %165 : vector<1x8x128xf32>
    %c3_76 = arith.constant 3 : index
    %c0_77 = arith.constant 0 : index
    %167 = memref.load %arg3[%c3_76, %c0_77] : memref<4x4xf32, #tpu.memory_space<smem>>
    %168 = vector.broadcast %167 : f32 to vector<1x8x128xf32>
    %169 = arith.mulf %34, %168 : vector<1x8x128xf32>
    %c3_78 = arith.constant 3 : index
    %c1_79 = arith.constant 1 : index
    %170 = memref.load %arg3[%c3_78, %c1_79] : memref<4x4xf32, #tpu.memory_space<smem>>
    %171 = vector.broadcast %170 : f32 to vector<1x8x128xf32>
    %172 = arith.mulf %58, %171 : vector<1x8x128xf32>
    %173 = arith.addf %169, %172 : vector<1x8x128xf32>
    %c3_80 = arith.constant 3 : index
    %c2_81 = arith.constant 2 : index
    %174 = memref.load %arg3[%c3_80, %c2_81] : memref<4x4xf32, #tpu.memory_space<smem>>
    %175 = vector.broadcast %174 : f32 to vector<1x8x128xf32>
    %176 = arith.mulf %82, %175 : vector<1x8x128xf32>
    %177 = arith.addf %173, %176 : vector<1x8x128xf32>
    %c3_82 = arith.constant 3 : index
    %c3_83 = arith.constant 3 : index
    %178 = memref.load %arg3[%c3_82, %c3_83] : memref<4x4xf32, #tpu.memory_space<smem>>
    %179 = vector.broadcast %178 : f32 to vector<1x8x128xf32>
    %180 = arith.mulf %106, %179 : vector<1x8x128xf32>
    %181 = arith.addf %177, %180 : vector<1x8x128xf32>
    %c3_84 = arith.constant 3 : index
    %182 = memref.load %arg4[%c3_84] : memref<4xf32, #tpu.memory_space<smem>>
    %183 = vector.broadcast %182 : f32 to vector<1x8x128xf32>
    %184 = arith.addf %181, %183 : vector<1x8x128xf32>
    %cst_85 = arith.constant 0.000000e+00 : f32
    %185 = vector.broadcast %cst_85 : f32 to vector<1x8x128xf32>
    %186 = arith.maximumf %184, %185 : vector<1x8x128xf32>
    %c0_86 = arith.constant 0 : index
    %c0_87 = arith.constant 0 : index
    %187 = memref.load %arg5[%c0_86, %c0_87] : memref<2x4xf32, #tpu.memory_space<smem>>
    %188 = vector.broadcast %187 : f32 to vector<1x8x128xf32>
    %189 = arith.mulf %126, %188 : vector<1x8x128xf32>
    %c0_88 = arith.constant 0 : index
    %c1_89 = arith.constant 1 : index
    %190 = memref.load %arg5[%c0_88, %c1_89] : memref<2x4xf32, #tpu.memory_space<smem>>
    %191 = vector.broadcast %190 : f32 to vector<1x8x128xf32>
    %192 = arith.mulf %146, %191 : vector<1x8x128xf32>
    %193 = arith.addf %189, %192 : vector<1x8x128xf32>
    %c0_90 = arith.constant 0 : index
    %c2_91 = arith.constant 2 : index
    %194 = memref.load %arg5[%c0_90, %c2_91] : memref<2x4xf32, #tpu.memory_space<smem>>
    %195 = vector.broadcast %194 : f32 to vector<1x8x128xf32>
    %196 = arith.mulf %166, %195 : vector<1x8x128xf32>
    %197 = arith.addf %193, %196 : vector<1x8x128xf32>
    %c0_92 = arith.constant 0 : index
    %c3_93 = arith.constant 3 : index
    %198 = memref.load %arg5[%c0_92, %c3_93] : memref<2x4xf32, #tpu.memory_space<smem>>
    %199 = vector.broadcast %198 : f32 to vector<1x8x128xf32>
    %200 = arith.mulf %186, %199 : vector<1x8x128xf32>
    %201 = arith.addf %197, %200 : vector<1x8x128xf32>
    %c0_94 = arith.constant 0 : index
    %202 = memref.load %arg6[%c0_94] : memref<2xf32, #tpu.memory_space<smem>>
    %203 = vector.broadcast %202 : f32 to vector<1x8x128xf32>
    %204 = arith.addf %201, %203 : vector<1x8x128xf32>
    %c1_95 = arith.constant 1 : index
    %c0_96 = arith.constant 0 : index
    %205 = memref.load %arg5[%c1_95, %c0_96] : memref<2x4xf32, #tpu.memory_space<smem>>
    %206 = vector.broadcast %205 : f32 to vector<1x8x128xf32>
    %207 = arith.mulf %126, %206 : vector<1x8x128xf32>
    %c1_97 = arith.constant 1 : index
    %c1_98 = arith.constant 1 : index
    %208 = memref.load %arg5[%c1_97, %c1_98] : memref<2x4xf32, #tpu.memory_space<smem>>
    %209 = vector.broadcast %208 : f32 to vector<1x8x128xf32>
    %210 = arith.mulf %146, %209 : vector<1x8x128xf32>
    %211 = arith.addf %207, %210 : vector<1x8x128xf32>
    %c1_99 = arith.constant 1 : index
    %c2_100 = arith.constant 2 : index
    %212 = memref.load %arg5[%c1_99, %c2_100] : memref<2x4xf32, #tpu.memory_space<smem>>
    %213 = vector.broadcast %212 : f32 to vector<1x8x128xf32>
    %214 = arith.mulf %166, %213 : vector<1x8x128xf32>
    %215 = arith.addf %211, %214 : vector<1x8x128xf32>
    %c1_101 = arith.constant 1 : index
    %c3_102 = arith.constant 3 : index
    %216 = memref.load %arg5[%c1_101, %c3_102] : memref<2x4xf32, #tpu.memory_space<smem>>
    %217 = vector.broadcast %216 : f32 to vector<1x8x128xf32>
    %218 = arith.mulf %186, %217 : vector<1x8x128xf32>
    %219 = arith.addf %215, %218 : vector<1x8x128xf32>
    %c1_103 = arith.constant 1 : index
    %220 = memref.load %arg6[%c1_103] : memref<2xf32, #tpu.memory_space<smem>>
    %221 = vector.broadcast %220 : f32 to vector<1x8x128xf32>
    %222 = arith.addf %219, %221 : vector<1x8x128xf32>
    %c0_104 = arith.constant 0 : index
    %c0_105 = arith.constant 0 : index
    %c0_106 = arith.constant 0 : index
    %c0_107 = arith.constant 0 : index
    %223 = vector.load %arg8[%c0_104, %c0_105, %c0_106, %c0_107] : memref<2x1x8x128xf32, #tpu.memory_space<vmem>>, vector<1x1x8x128xf32>
    %224 = vector.shape_cast %223 : vector<1x1x8x128xf32> to vector<1x8x128xf32>
    %225 = vector.shape_cast %204 : vector<1x8x128xf32> to vector<1x1x8x128xf32>
    tpu.vector_store %arg8[%c0_104, %c0_105, %c0_106, %c0_107], %225 {strides = array<i32>} : memref<2x1x8x128xf32, #tpu.memory_space<vmem>>, vector<1x1x8x128xf32>,
    %c1_108 = arith.constant 1 : index
    %c0_109 = arith.constant 0 : index
    %c0_110 = arith.constant 0 : index
    %c0_111 = arith.constant 0 : index
    %226 = vector.load %arg8[%c1_108, %c0_109, %c0_110, %c0_111] : memref<2x1x8x128xf32, #tpu.memory_space<vmem>>, vector<1x1x8x128xf32>
    %227 = vector.shape_cast %226 : vector<1x1x8x128xf32> to vector<1x8x128xf32>
    %228 = vector.shape_cast %222 : vector<1x8x128xf32> to vector<1x1x8x128xf32>
    tpu.vector_store %arg8[%c1_108, %c0_109, %c0_110, %c0_111], %228 {strides = array<i32>} : memref<2x1x8x128xf32, #tpu.memory_space<vmem>>, vector<1x1x8x128xf32>,
    return
  }
  func.func @transform_0(%arg0: i32) -> (i32, i32) {
    %c0_i32 = arith.constant 0 : i32
    %c0_i32_0 = arith.constant 0 : i32
    %c0_i32_1 = arith.constant 0 : i32
    return %c0_i32, %c0_i32_0 : i32, i32
  }
  func.func @transform_1(%arg0: i32) -> i32 {
    %c0_i32 = arith.constant 0 : i32
    %c0_i32_0 = arith.constant 0 : i32
    return %c0_i32 : i32
  }
  func.func @transform_2(%arg0: i32) -> (i32, i32) {
    %c0_i32 = arith.constant 0 : i32
    %c0_i32_0 = arith.constant 0 : i32
    %c0_i32_1 = arith.constant 0 : i32
    return %c0_i32, %c0_i32_0 : i32, i32
  }
  func.func @transform_3(%arg0: i32) -> i32 {
    %c0_i32 = arith.constant 0 : i32
    %c0_i32_0 = arith.constant 0 : i32
    return %c0_i32 : i32
  }
  func.func @transform_4(%arg0: i32) -> (i32, i32) {
    %c0_i32 = arith.constant 0 : i32
    %c0_i32_0 = arith.constant 0 : i32
    %c0_i32_1 = arith.constant 0 : i32
    return %c0_i32, %c0_i32_0 : i32, i32
  }
  func.func @transform_5(%arg0: i32) -> i32 {
    %c0_i32 = arith.constant 0 : i32
    %c0_i32_0 = arith.constant 0 : i32
    return %c0_i32 : i32
  }
  func.func @transform_6(%arg0: i32) -> (i32, i32, i32, i32) {
    %c0_i32 = arith.constant 0 : i32
    %c0_i32_0 = arith.constant 0 : i32
    %c0_i32_1 = arith.constant 0 : i32
    %c0_i32_2 = arith.constant 0 : i32
    return %c0_i32, %arg0, %c0_i32_0, %c0_i32_1 : i32, i32, i32, i32
  }
  func.func @transform_7(%arg0: i32) -> (i32, i32, i32, i32) {
    %c0_i32 = arith.constant 0 : i32
    %c0_i32_0 = arith.constant 0 : i32
    %c0_i32_1 = arith.constant 0 : i32
    %c0_i32_2 = arith.constant 0 : i32
    return %c0_i32, %arg0, %c0_i32_0, %c0_i32_1 : i32, i32, i32, i32
  }
}

</mosaic_0001>

<llo_original>
// kernel: tpu_custom_call.1
$region0: #{tpu_custom_call.1}
  #allocation0 [shape = 'u32[]', space=smem, size = 0x4, offset = 0x4, fixed_abs, tag = 'smem constant byte address 0x4 - core index']
  #allocation1 [shape = 'u32[144,128]{1,0:T(1,128)}', space=vmem, size = 0x12000, scoped, tag = 'internal scratch']
  %s0 = inlined_call_operand.hbm [shape: f32[4,5], index: 0, kind: input, shape index: {}]
  %s1 = inlined_call_operand.vmem [shape: f32[4], index: 1, kind: input, shape index: {}]
  %s2 = inlined_call_operand.vmem [shape: f32[4,4], index: 2, kind: input, shape index: {}]
  %s3 = inlined_call_operand.vmem [shape: f32[4], index: 3, kind: input, shape index: {}]
  %s4 = inlined_call_operand.vmem [shape: f32[2,4], index: 4, kind: input, shape index: {}]
  %s5 = inlined_call_operand.vmem [shape: f32[2], index: 5, kind: input, shape index: {}]
  %s6 = inlined_call_operand.hbm [shape: f32[5,1,8,128], index: 6, kind: input, shape index: {}]
  %s7 = inlined_call_operand.hbm [shape: f32[2,1,8,128], index: 7, kind: output, shape index: {}]
  %s8 = sld [smem:[#allocation0]]
  $region66: #{tpu_custom_call.1} parent=0
    _
  %s10 = ssub.s32 1, %s8
  %s11 = scalar_select 0, %s10, %s8
  $region1: #{tpu_custom_call.1} parent=0
    #allocation2 [shape = 'u8[2048]{0}', space=smem, size = 0x800, scoped, tag = 'input window, operand 0, single buffered']
    #allocation3 [shape = 's32[1]{0}', space=sflag, size = 0x4, scoped, tag = 'scoped memory for tpu_custom_call.1']
    #allocation4 [shape = 's32[1]{0}', space=sflag, size = 0x4, scoped, tag = 'scoped memory for tpu_custom_call.1']
    #allocation5 [shape = 's32[1]{0}', space=sflag, size = 0x4, scoped, tag = 'scoped memory for tpu_custom_call.1']
    #allocation6 [shape = 's32[1]{0}', space=sflag, size = 0x4, scoped, tag = 'scoped memory for tpu_custom_call.1']
    #allocation7 [shape = 'u8[512]{0}', space=smem, size = 0x200, scoped, tag = 'input window, operand 1, single buffered']
    #allocation8 [shape = 'u8[2048]{0}', space=smem, size = 0x800, scoped, tag = 'input window, operand 2, single buffered']
    #allocation9 [shape = 's32[1]{0}', space=sflag, size = 0x4, scoped, tag = 'scoped memory for tpu_custom_call.1']
    #allocation10 [shape = 'u8[512]{0}', space=smem, size = 0x200, scoped, tag = 'input window, operand 3, single buffered']
    #allocation11 [shape = 'u8[1024]{0}', space=smem, size = 0x400, scoped, tag = 'input window, operand 4, single buffered']
    #allocation12 [shape = 's32[1]{0}', space=sflag, size = 0x4, scoped, tag = 'scoped memory for tpu_custom_call.1']
    #allocation13 [shape = 'u8[512]{0}', space=smem, size = 0x200, scoped, tag = 'input window, operand 5, single buffered']
    #allocation14 [shape = 'u8[20480]{0}', space=vmem, size = 0x5000, scoped, tag = 'input window, operand 6, single buffered']
    #allocation15 [shape = 'u8[8192]{0}', space=vmem, size = 0x2000, scoped, tag = 'output window, operand 0, single buffered']
    %12 = vsyncpa [#allocation5], 0
    %13 = vsyncpa [#allocation6], 0
    %14 = vsyncpa [#allocation9], 0
    %15 = vsyncpa [#allocation12], 0
    %16 = vsyncpa [#allocation3], 0
    %17 = vsyncpa [#allocation4], 0
    // Predicated region
    $region2: #{tpu_custom_call.1} parent=1 // pred_check
      _
    $region3: #{tpu_custom_call.1} parent=1 // pred_check_branch
      %19 = sbr.rel (0) target = $region5
    $region4: #{tpu_custom_call.1} parent=1 // pred_region
      %s21 = ssub.s32 64, 64
      %22 = vsyncadd [#allocation5], %s21
      %25 = dma.hbm_to_smem %s0, 64, [#allocation2], [#allocation5]
    $region5: #{tpu_custom_call.1} parent=1 // pred_fallthru
      _
    // Predicated region
    $region6: #{tpu_custom_call.1} parent=1 // pred_check
      _
    $region7: #{tpu_custom_call.1} parent=1 // pred_check_branch
      %27 = sbr.rel (0) target = $region9
    $region8: #{tpu_custom_call.1} parent=1 // pred_region
      %s29 = ssub.s32 16, 16
      %30 = vsyncadd [#allocation6], %s29
      %s32 = sshll.u32 %s1, 4
      %s33 = int_to_ptr.vmem [resolvable:$true] %s32
      %35 = dma.vmem_to_smem %s33, 16, [#allocation7], [#allocation6]
    $region9: #{tpu_custom_call.1} parent=1 // pred_fallthru
      _
    // Predicated region
    $region10: #{tpu_custom_call.1} parent=1 // pred_check
      _
    $region11: #{tpu_custom_call.1} parent=1 // pred_check_branch
      %37 = sbr.rel (0) target = $region13
    $region12: #{tpu_custom_call.1} parent=1 // pred_region
      %s39 = ssub.s32 64, 64
      %40 = vsyncadd [#allocation9], %s39
      %s42 = sshll.u32 %s2, 4
      %s43 = int_to_ptr.vmem [resolvable:$true] %s42
      %45 = dma.vmem_to_smem %s43, 64, [#allocation8], [#allocation9]
    $region13: #{tpu_custom_call.1} parent=1 // pred_fallthru
      _
    // Predicated region
    $region14: #{tpu_custom_call.1} parent=1 // pred_check
      _
    $region15: #{tpu_custom_call.1} parent=1 // pred_check_branch
      %47 = sbr.rel (0) target = $region17
    $region16: #{tpu_custom_call.1} parent=1 // pred_region
      %s49 = ssub.s32 16, 16
      %50 = vsyncadd [#allocation9], %s49
      %s52 = sshll.u32 %s3, 4
      %s53 = int_to_ptr.vmem [resolvable:$true] %s52
      %55 = dma.vmem_to_smem %s53, 16, [#allocation10], [#allocation9]
    $region17: #{tpu_custom_call.1} parent=1 // pred_fallthru
      _
    // Predicated region
    $region18: #{tpu_custom_call.1} parent=1 // pred_check
      _
    $region19: #{tpu_custom_call.1} parent=1 // pred_check_branch
      %57 = sbr.rel (0) target = $region21
    $region20: #{tpu_custom_call.1} parent=1 // pred_region
      %s59 = ssub.s32 32, 32
      %60 = vsyncadd [#allocation12], %s59
      %s62 = sshll.u32 %s4, 4
      %s63 = int_to_ptr.vmem [resolvable:$true] %s62
      %65 = dma.vmem_to_smem %s63, 32, [#allocation11], [#allocation12]
    $region21: #{tpu_custom_call.1} parent=1 // pred_fallthru
      _
    // Predicated region
    $region22: #{tpu_custom_call.1} parent=1 // pred_check
      _
    $region23: #{tpu_custom_call.1} parent=1 // pred_check_branch
      %67 = sbr.rel (0) target = $region25
    $region24: #{tpu_custom_call.1} parent=1 // pred_region
      %s69 = ssub.s32 16, 16
      %70 = vsyncadd [#allocation12], %s69
      %s72 = sshll.u32 %s5, 4
      %s73 = int_to_ptr.vmem [resolvable:$true] %s72
      %75 = dma.vmem_to_smem %s73, 16, [#allocation13], [#allocation12]
    $region25: #{tpu_custom_call.1} parent=1 // pred_fallthru
      _
    // Predicated region
    $region26: #{tpu_custom_call.1} parent=1 // pred_check
      _
    $region27: #{tpu_custom_call.1} parent=1 // pred_check_branch
      %77 = sbr.rel (0) target = $region29
    $region28: #{tpu_custom_call.1} parent=1 // pred_region
      %s79 = ssub.s32 640, 640
      %80 = vsyncadd [#allocation3], %s79
      %s81 = sshll.u32 [#allocation14], 4
      %s82 = int_to_ptr.vmem [resolvable:$true] %s81
      %87 = dma.hbm_to_vmem [thread:$0]  %s6, 640, %s82, [#allocation3], 128, 128, 8
    $region29: #{tpu_custom_call.1} parent=1 // pred_fallthru
      _
    // Predicated region
    $region30: #{tpu_custom_call.1} parent=1 // pred_check
      _
    $region31: #{tpu_custom_call.1} parent=1 // pred_check_branch
      %89 = sbr.rel (0) target = $region33
    $region32: #{tpu_custom_call.1} parent=1 // pred_region
      %90 = dma.done [#allocation5], 64
    $region33: #{tpu_custom_call.1} parent=1 // pred_fallthru
      _
    // Predicated region
    $region34: #{tpu_custom_call.1} parent=1 // pred_check
      _
    $region35: #{tpu_custom_call.1} parent=1 // pred_check_branch
      %92 = sbr.rel (0) target = $region37
    $region36: #{tpu_custom_call.1} parent=1 // pred_region
      %93 = dma.done [#allocation6], 16
    $region37: #{tpu_custom_call.1} parent=1 // pred_fallthru
      _
    // Predicated region
    $region38: #{tpu_custom_call.1} parent=1 // pred_check
      _
    $region39: #{tpu_custom_call.1} parent=1 // pred_check_branch
      %95 = sbr.rel (0) target = $region41
    $region40: #{tpu_custom_call.1} parent=1 // pred_region
      %96 = dma.done [#allocation9], 64
    $region41: #{tpu_custom_call.1} parent=1 // pred_fallthru
      _
    // Predicated region
    $region42: #{tpu_custom_call.1} parent=1 // pred_check
      _
    $region43: #{tpu_custom_call.1} parent=1 // pred_check_branch
      %98 = sbr.rel (0) target = $region45
    $region44: #{tpu_custom_call.1} parent=1 // pred_region
      %99 = dma.done [#allocation9], 16
    $region45: #{tpu_custom_call.1} parent=1 // pred_fallthru
      _
    // Predicated region
    $region46: #{tpu_custom_call.1} parent=1 // pred_check
      _
    $region47: #{tpu_custom_call.1} parent=1 // pred_check_branch
      %101 = sbr.rel (0) target = $region49
    $region48: #{tpu_custom_call.1} parent=1 // pred_region
      %102 = dma.done [#allocation12], 32
    $region49: #{tpu_custom_call.1} parent=1 // pred_fallthru
      _
    // Predicated region
    $region50: #{tpu_custom_call.1} parent=1 // pred_check
      _
    $region51: #{tpu_custom_call.1} parent=1 // pred_check_branch
      %104 = sbr.rel (0) target = $region53
    $region52: #{tpu_custom_call.1} parent=1 // pred_region
      %105 = dma.done [#allocation12], 16
    $region53: #{tpu_custom_call.1} parent=1 // pred_fallthru
      _
    // Predicated region
    $region54: #{tpu_custom_call.1} parent=1 // pred_check
      _
    $region55: #{tpu_custom_call.1} parent=1 // pred_check_branch
      %107 = sbr.rel (0) target = $region57
    $region56: #{tpu_custom_call.1} parent=1 // pred_region
      %108 = dma.done [#allocation3], 640
    $region57: #{tpu_custom_call.1} parent=1 // pred_fallthru
      _
    %109 = sfence
    %v110 = vld [vmem:[#allocation14] sm:$0xff]
    %v111 = vld [vmem:[#allocation14 + $0x8] sm:$0xff]
    %v112 = vld [vmem:[#allocation14 + $0x10] sm:$0xff]
    %v113 = vld [vmem:[#allocation14 + $0x18] sm:$0xff]
    %v114 = vld [vmem:[#allocation14 + $0x20] sm:$0xff]
    %s115 = sld [smem:[#allocation2]]
    %v116 = vstv %s115
    %v117 = vmul.f32 %v110, %v116
    %s118 = sld [smem:[#allocation2 + $0x1]]
    %v119 = vstv %s118
    %v120 = vmul.f32 %v111, %v119
    %v121 = vadd.f32 %v117, %v120
    %s122 = sld [smem:[#allocation2 + $0x2]]
    %v123 = vstv %s122
    %v124 = vmul.f32 %v112, %v123
    %v125 = vadd.f32 %v121, %v124
    %s126 = sld [smem:[#allocation2 + $0x3]]
    %v127 = vstv %s126
    %v128 = vmul.f32 %v113, %v127
    %v129 = vadd.f32 %v125, %v128
    %s130 = sld [smem:[#allocation2 + $0x4]]
    %v131 = vstv %s130
    %v132 = vmul.f32 %v114, %v131
    %v133 = vadd.f32 %v129, %v132
    %s134 = sld [smem:[#allocation7]]
    %v135 = vstv %s134
    %v136 = vadd.f32 %v133, %v135
    %v137 = vmax.f32 %v136, 0.0
    %s138 = sld [smem:[#allocation2 + $0x80]]
    %v139 = vstv %s138
    %v140 = vmul.f32 %v110, %v139
    %s141 = sld [smem:[#allocation2 + $0x81]]
    %v142 = vstv %s141
    %v143 = vmul.f32 %v111, %v142
    %v144 = vadd.f32 %v140, %v143
    %s145 = sld [smem:[#allocation2 + $0x82]]
    %v146 = vstv %s145
    %v147 = vmul.f32 %v112, %v146
    %v148 = vadd.f32 %v144, %v147
    %s149 = sld [smem:[#allocation2 + $0x83]]
    %v150 = vstv %s149
    %v151 = vmul.f32 %v113, %v150
    %v152 = vadd.f32 %v148, %v151
    %s153 = sld [smem:[#allocation2 + $0x84]]
    %v154 = vstv %s153
    %v155 = vmul.f32 %v114, %v154
    %v156 = vadd.f32 %v152, %v155
    %s157 = sld [smem:[#allocation7 + $0x1]]
    %v158 = vstv %s157
    %v159 = vadd.f32 %v156, %v158
    %v160 = vmax.f32 %v159, 0.0
    %s161 = sld [smem:[#allocation2 + $0x100]]
    %v162 = vstv %s161
    %v163 = vmul.f32 %v110, %v162
    %s164 = sld [smem:[#allocation2 + $0x101]]
    %v165 = vstv %s164
    %v166 = vmul.f32 %v111, %v165
    %v167 = vadd.f32 %v163, %v166
    %s168 = sld [smem:[#allocation2 + $0x102]]
    %v169 = vstv %s168
    %v170 = vmul.f32 %v112, %v169
    %v171 = vadd.f32 %v167, %v170
    %s172 = sld [smem:[#allocation2 + $0x103]]
    %v173 = vstv %s172
    %v174 = vmul.f32 %v113, %v173
    %v175 = vadd.f32 %v171, %v174
    %s176 = sld [smem:[#allocation2 + $0x104]]
    %v177 = vstv %s176
    %v178 = vmul.f32 %v114, %v177
    %v179 = vadd.f32 %v175, %v178
    %s180 = sld [smem:[#allocation7 + $0x2]]
    %v181 = vstv %s180
    %v182 = vadd.f32 %v179, %v181
    %v183 = vmax.f32 %v182, 0.0
    %s184 = sld [smem:[#allocation2 + $0x180]]
    %v185 = vstv %s184
    %v186 = vmul.f32 %v110, %v185
    %s187 = sld [smem:[#allocation2 + $0x181]]
    %v188 = vstv %s187
    %v189 = vmul.f32 %v111, %v188
    %v190 = vadd.f32 %v186, %v189
    %s191 = sld [smem:[#allocation2 + $0x182]]
    %v192 = vstv %s191
    %v193 = vmul.f32 %v112, %v192
    %v194 = vadd.f32 %v190, %v193
    %s195 = sld [smem:[#allocation2 + $0x183]]
    %v196 = vstv %s195
    %v197 = vmul.f32 %v113, %v196
    %v198 = vadd.f32 %v194, %v197
    %s199 = sld [smem:[#allocation2 + $0x184]]
    %v200 = vstv %s199
    %v201 = vmul.f32 %v114, %v200
    %v202 = vadd.f32 %v198, %v201
    %s203 = sld [smem:[#allocation7 + $0x3]]
    %v204 = vstv %s203
    %v205 = vadd.f32 %v202, %v204
    %v206 = vmax.f32 %v205, 0.0
    %s207 = sld [smem:[#allocation8]]
    %v208 = vstv %s207
    %v209 = vmul.f32 %v137, %v208
    %s210 = sld [smem:[#allocation8 + $0x1]]
    %v211 = vstv %s210
    %v212 = vmul.f32 %v160, %v211
    %v213 = vadd.f32 %v209, %v212
    %s214 = sld [smem:[#allocation8 + $0x2]]
    %v215 = vstv %s214
    %v216 = vmul.f32 %v183, %v215
    %v217 = vadd.f32 %v213, %v216
    %s218 = sld [smem:[#allocation8 + $0x3]]
    %v219 = vstv %s218
    %v220 = vmul.f32 %v206, %v219
    %v221 = vadd.f32 %v217, %v220
    %s222 = sld [smem:[#allocation10]]
    %v223 = vstv %s222
    %v224 = vadd.f32 %v221, %v223
    %v225 = vmax.f32 %v224, 0.0
    %s226 = sld [smem:[#allocation8 + $0x80]]
    %v227 = vstv %s226
    %v228 = vmul.f32 %v137, %v227
    %s229 = sld [smem:[#allocation8 + $0x81]]
    %v230 = vstv %s229
    %v231 = vmul.f32 %v160, %v230
    %v232 = vadd.f32 %v228, %v231
    %s233 = sld [smem:[#allocation8 + $0x82]]
    %v234 = vstv %s233
    %v235 = vmul.f32 %v183, %v234
    %v236 = vadd.f32 %v232, %v235
    %s237 = sld [smem:[#allocation8 + $0x83]]
    %v238 = vstv %s237
    %v239 = vmul.f32 %v206, %v238
    %v240 = vadd.f32 %v236, %v239
    %s241 = sld [smem:[#allocation10 + $0x1]]
    %v242 = vstv %s241
    %v243 = vadd.f32 %v240, %v242
    %v244 = vmax.f32 %v243, 0.0
    %s245 = sld [smem:[#allocation8 + $0x100]]
    %v246 = vstv %s245
    %v247 = vmul.f32 %v137, %v246
    %s248 = sld [smem:[#allocation8 + $0x101]]
    %v249 = vstv %s248
    %v250 = vmul.f32 %v160, %v249
    %v251 = vadd.f32 %v247, %v250
    %s252 = sld [smem:[#allocation8 + $0x102]]
    %v253 = vstv %s252
    %v254 = vmul.f32 %v183, %v253
    %v255 = vadd.f32 %v251, %v254
    %s256 = sld [smem:[#allocation8 + $0x103]]
    %v257 = vstv %s256
    %v258 = vmul.f32 %v206, %v257
    %v259 = vadd.f32 %v255, %v258
    %s260 = sld [smem:[#allocation10 + $0x2]]
    %v261 = vstv %s260
    %v262 = vadd.f32 %v259, %v261
    %v263 = vmax.f32 %v262, 0.0
    %s264 = sld [smem:[#allocation8 + $0x180]]
    %v265 = vstv %s264
    %v266 = vmul.f32 %v137, %v265
    %s267 = sld [smem:[#allocation8 + $0x181]]
    %v268 = vstv %s267
    %v269 = vmul.f32 %v160, %v268
    %v270 = vadd.f32 %v266, %v269
    %s271 = sld [smem:[#allocation8 + $0x182]]
    %v272 = vstv %s271
    %v273 = vmul.f32 %v183, %v272
    %v274 = vadd.f32 %v270, %v273
    %s275 = sld [smem:[#allocation8 + $0x183]]
    %v276 = vstv %s275
    %v277 = vmul.f32 %v206, %v276
    %v278 = vadd.f32 %v274, %v277
    %s279 = sld [smem:[#allocation10 + $0x3]]
    %v280 = vstv %s279
    %v281 = vadd.f32 %v278, %v280
    %v282 = vmax.f32 %v281, 0.0
    %s283 = sld [smem:[#allocation11]]
    %v284 = vstv %s283
    %v285 = vmul.f32 %v225, %v284
    %s286 = sld [smem:[#allocation11 + $0x1]]
    %v287 = vstv %s286
    %v288 = vmul.f32 %v244, %v287
    %v289 = vadd.f32 %v285, %v288
    %s290 = sld [smem:[#allocation11 + $0x2]]
    %v291 = vstv %s290
    %v292 = vmul.f32 %v263, %v291
    %v293 = vadd.f32 %v289, %v292
    %s294 = sld [smem:[#allocation11 + $0x3]]
    %v295 = vstv %s294
    %v296 = vmul.f32 %v282, %v295
    %v297 = vadd.f32 %v293, %v296
    %s298 = sld [smem:[#allocation13]]
    %v299 = vstv %s298
    %v300 = vadd.f32 %v297, %v299
    %s301 = sld [smem:[#allocation11 + $0x80]]
    %v302 = vstv %s301
    %v303 = vmul.f32 %v225, %v302
    %s304 = sld [smem:[#allocation11 + $0x81]]
    %v305 = vstv %s304
    %v306 = vmul.f32 %v244, %v305
    %v307 = vadd.f32 %v303, %v306
    %s308 = sld [smem:[#allocation11 + $0x82]]
    %v309 = vstv %s308
    %v310 = vmul.f32 %v263, %v309
    %v311 = vadd.f32 %v307, %v310
    %s312 = sld [smem:[#allocation11 + $0x83]]
    %v313 = vstv %s312
    %v314 = vmul.f32 %v282, %v313
    %v315 = vadd.f32 %v311, %v314
    %s316 = sld [smem:[#allocation13 + $0x1]]
    %v317 = vstv %s316
    %v318 = vadd.f32 %v315, %v317
    %319 = vst [vmem:[#allocation15] sm:$0xff] %v300
    %s320 = scalar_lea.vmem [#allocation15], 8
    %321 = vst [vmem:[%s320] sm:$0xff] %v318
    // Predicated region
    $region58: #{tpu_custom_call.1} parent=1 // pred_check
      _
    $region59: #{tpu_custom_call.1} parent=1 // pred_check_branch
      %323 = sbr.rel (0) target = $region61
    $region60: #{tpu_custom_call.1} parent=1 // pred_region
      %s325 = ssub.s32 256, 256
      %326 = vsyncadd [#allocation4], %s325
      %s327 = sshll.u32 [#allocation15], 4
      %s328 = int_to_ptr.vmem [resolvable:$true] %s327
      %333 = dma.vmem_to_hbm [thread:$0]  %s328, 256, %s7, [#allocation4], 128, 128, 8
    $region61: #{tpu_custom_call.1} parent=1 // pred_fallthru
      _
    // Predicated region
    $region62: #{tpu_custom_call.1} parent=1 // pred_check
      _
    $region63: #{tpu_custom_call.1} parent=1 // pred_check_branch
      %335 = sbr.rel (0) target = $region65
    $region64: #{tpu_custom_call.1} parent=1 // pred_region
      %336 = dma.done [#allocation4], 256
    $region65: #{tpu_custom_call.1} parent=1 // pred_fallthru
      _
    %337 = vsyncpa [#allocation3], 1
    %338 = vsyncpa [#allocation4], 1
    %339 = vsyncpa [#allocation5], 1
    %340 = vsyncpa [#allocation6], 1
    %341 = vsyncpa [#allocation9], 1
    %342 = vsyncpa [#allocation12], 1

</llo_original>
